<compile_context>
chip_gen: v6e
topology: v6e:2x2x1
jax: 0.10.0
libtpu: 0.0.40
codegen_flags: <defaults>
</compile_context>

<pallas_src>
import functools
import math

import jax
import jax.numpy as jnp
import numpy as np
from jax.experimental import pallas as pl
from jax.experimental.pallas import tpu as pltpu


# ----------------------------------------------------------------------------
# In-kernel math helpers (pure jnp, traced inside the Pallas kernel)
# ----------------------------------------------------------------------------
def _layer_norm(x, gamma, beta, eps=1e-5):
    mean = jnp.mean(x, axis=-1, keepdims=True)
    xc = x - mean
    var = jnp.mean(xc * xc, axis=-1, keepdims=True)
    return xc * jax.lax.rsqrt(var + eps) * gamma + beta


def _sigmoid(x):
    # Numerically stable: exp argument is always <= 0 (EUP slot; VALU stays free).
    e = jnp.exp(-jnp.abs(x))
    return jnp.where(x >= 0, 1.0 / (1.0 + e), e / (1.0 + e))


# ----------------------------------------------------------------------------
# Fused RWKV block kernel: one grid step == `batch_block` sequences.
# Activations are laid out flattened as (Bb*T, C) so all matmuls see a tall M.
# ----------------------------------------------------------------------------
def rwkv_block_kernel(x_ref, st_ref, ln_ref, wkvr_ref, wo_ref, wc_ref, wvc_ref,
                      y_ref, *, seq_len):
    T = seq_len
    Mb, C = x_ref.shape                       # Mb = Bb * T
    Bb = Mb // T
    F = wc_ref.shape[1] - C

    x = x_ref[...].astype(jnp.float32)        # (Mb, C) activations in f32

    ln1_g, ln1_b = ln_ref[0:1, :], ln_ref[1:2, :]
    ln2_g, ln2_b = ln_ref[2:3, :], ln_ref[3:4, :]

    # Per-row time index within its sequence; computed ONCE and reused for both
    # token shifts and all WKV scan masks (JAX does not CSE broadcast_in_dim).
    t_local = jax.lax.broadcasted_iota(jnp.int32, (Mb, C), 0) % T
    t_is_zero = t_local == 0

    # Token-shift state rows: st_rows[b*T + t] = state[b] (only t==0 rows used).
    st_rows = jnp.concatenate(
        [jnp.broadcast_to(st_ref[b].astype(jnp.float32), (T, C)) for b in range(Bb)],
        axis=0)

    def token_shift(cur):
        # cur[t-1] for t>0, state for t==0; roll uses the XLU slot, mask on VPU.
        return jnp.where(t_is_zero, st_rows, pltpu.roll(cur, shift=1, axis=0))

    # ---------------- time-mix (WKV "attention") branch ----------------
    x_tm = _layer_norm(x, ln1_g, ln1_b)
    x_sh = token_shift(x_tm)

    # Mix coefficients were folded into wkvr on the host:
    #   [x_tm | x_sh] (Mb,2C) @ W_kvr (2C,3C) == k,v,r of the reference.
    mixed = jnp.concatenate([x_tm, x_sh], axis=1).astype(jnp.bfloat16)
    kvr = jnp.dot(mixed, wkvr_ref[...], preferred_element_type=jnp.float32)
    k, v, r = kvr[:, 0:C], kvr[:, C:2 * C], kvr[:, 2 * C:3 * C]

    decay = _sigmoid(k)
    recept = _sigmoid(r)

    # Linear recurrence s_t = a_t * s_{t-1} + b_t  (s_{-1}=0), per sequence,
    # evaluated with a log2(T)-depth Hillis-Steele scan over full-width tiles.
    # Rolls cross sequence boundaries but those lanes are masked by t_local.
    a = decay
    b = (1.0 - decay) * v
    d = 1
    while d < T:
        valid = t_local >= d
        a_sh = pltpu.roll(a, shift=d, axis=0)
        b_sh = pltpu.roll(b, shift=d, axis=0)
        b = jnp.where(valid, a * b_sh + b, b)
        a = jnp.where(valid, a * a_sh, a)
        d *= 2
    s = b                                      # s_t = prefix composition applied to 0

    wkv = _layer_norm(recept * s + 0.1 * v, 1.0, 0.0)   # F.layer_norm w/o affine
    # TODO(synk): dropout implemented as identity (eval / inference mode).
    x = x + jnp.dot(wkv.astype(jnp.bfloat16), wo_ref[...],
                    preferred_element_type=jnp.float32)

    # ---------------- channel-mix (FFN) branch ----------------
    x_cm = _layer_norm(x, ln2_g, ln2_b)
    x_sh_c = token_shift(x_cm)

    mixed_c = jnp.concatenate([x_cm, x_sh_c], axis=1).astype(jnp.bfloat16)
    krc = jnp.dot(mixed_c, wc_ref[...], preferred_element_type=jnp.float32)  # (Mb, F+C)
    kc = jnp.maximum(krc[:, :F], 0.0)
    rc = krc[:, F:]
    vk = jnp.dot((kc * kc).astype(jnp.bfloat16), wvc_ref[...],
                 preferred_element_type=jnp.float32)

    x = x + _sigmoid(rc) * vk
    y_ref[...] = x.astype(y_ref.dtype)


# ----------------------------------------------------------------------------
# Host-side weight folding (done once per call; in practice pre-fold offline).
# ----------------------------------------------------------------------------
def _fold_weights(params):
    C = params["wk"].shape[0]

    def fold(mix, w):                     # mix (1,C), w (C,out) -> scaled rows
        top = mix.reshape(C, 1) * w
        bot = (1.0 - mix).reshape(C, 1) * w
        return top, bot

    k_t, k_b = fold(params["tmk"], params["wk"])
    v_t, v_b = fold(params["tmv"], params["wv"])
    r_t, r_b = fold(params["tmr"], params["wr"])
    w_kvr = jnp.concatenate(
        [jnp.concatenate([k_t, v_t, r_t], axis=1),
         jnp.concatenate([k_b, v_b, r_b], axis=1)], axis=0).astype(jnp.bfloat16)

    kc_t, kc_b = fold(params["cmk"], params["wkc"])
    rc_t, rc_b = fold(params["cmr"], params["wrc"])
    w_c = jnp.concatenate(
        [jnp.concatenate([kc_t, rc_t], axis=1),
         jnp.concatenate([kc_b, rc_b], axis=1)], axis=0).astype(jnp.bfloat16)

    wo = params["wo"].astype(jnp.bfloat16)
    wvc = params["wvc"].astype(jnp.bfloat16)

    ln = jnp.concatenate([params["ln1_g"], params["ln1_b"],
                          params["ln2_g"], params["ln2_b"]], axis=0)  # (4, C) f32
    return ln, w_kvr, wo, w_c, wvc


def _pick_batch_block(B, T):
    # Fill the MXU M dimension (target ~128 rows per grid step) with a divisor
    # of B.  On v7x with large B you may prefer batch_block=B//2 so the size-2
    # grid splits across both TensorCores.
    target = max(1, -(-128 // T))
    best = 1
    for cand in range(1, B + 1):
        if B % cand == 0 and cand <= target:
            best = cand
    return best


# ----------------------------------------------------------------------------
# pallas_call wrapper: one fused launch for the whole block
# ----------------------------------------------------------------------------
def rwkv_block_forward(x, params, state=None, *, batch_block=None):
    B, T, C = x.shape
    F_ = params["wkc"].shape[1]
    if state is None:
        state = jnp.zeros((B, C), x.dtype)

    if batch_block is None:
        batch_block = _pick_batch_block(B, T)
    assert B % batch_block == 0
    grid_b = B // batch_block
    Mb = batch_block * T
    assert grid_b == 1 or Mb % 8 == 0, "batch_block*T must be a multiple of 8"

    ln, w_kvr, wo, w_c, wvc = _fold_weights(params)

    x2d = x.reshape(B * T, C)                       # host reshape = free view
    st3 = state[:, None, :].astype(jnp.float32)     # (B, 1, C)

    inv = lambda shape: pl.BlockSpec(shape, lambda g: (0,) * len(shape))  # grid-invariant

    grid_spec = pltpu.PrefetchScalarGridSpec(
        num_scalar_prefetch=0,
        grid=(grid_b,),
        in_specs=[
            pl.BlockSpec((Mb, C), lambda g: (g, 0)),              # x (flattened rows)
            pl.BlockSpec((batch_block, 1, C), lambda g: (g, 0, 0)),  # token-shift state
            inv((4, C)),                                          # packed LN params
            inv((2 * C, 3 * C)),                                  # folded k/v/r weights
            inv((C, C)),                                          # output proj
            inv((2 * C, F_ + C)),                                 # folded key_c/receptance_c
            inv((F_, C)),                                         # value_c
        ],
        out_specs=pl.BlockSpec((Mb, C), lambda g: (g, 0)),
    )

    y2d = pl.pallas_call(
        functools.partial(rwkv_block_kernel, seq_len=T),
        out_shape=jax.ShapeDtypeStruct((B * T, C), jnp.float32),
        grid_spec=grid_spec,
        compiler_params=pltpu.CompilerParams(
            dimension_semantics=("parallel",),          # batch blocks across cores
            vmem_limit_bytes=48 * 1024 * 1024),         # v5e default (16 MiB) is too low
    )(x2d, st3, ln, w_kvr, wo, w_c, wvc)

    y = y2d.reshape(B, T, C)
    return y, y[:, -1, :]                               # new_state = x[:, -1]


# ----------------------------------------------------------------------------
# Parameters (deterministic; Linear weights stored as (in, out) == torch W.T)
# ----------------------------------------------------------------------------
def init_params(key, d_model, d_ff=None):
    d_ff = d_ff or 4 * d_model
    keys = iter(jax.random.split(key, 16))

    def linear(fan_in, fan_out):
        bound = 1.0 / math.sqrt(fan_in)
        return jax.random.uniform(next(keys), (fan_in, fan_out), jnp.float32,
                                  -bound, bound)

    def mix():
        # PyTorch initializes mix params to ones; use values in (0,1) so the
        # token-shift path is actually exercised by the test.
        return jax.random.uniform(next(keys), (1, d_model), jnp.float32, 0.0, 1.0)

    return dict(
        ln1_g=jnp.ones((1, d_model), jnp.float32),
        ln1_b=jnp.zeros((1, d_model), jnp.float32),
        tmk=mix(), tmv=mix(), tmr=mix(),
        wk=linear(d_model, d_model), wv=linear(d_model, d_model),
        wr=linear(d_model, d_model), wo=linear(d_model, d_model),
        ln2_g=jnp.ones((1, d_model), jnp.float32),
        ln2_b=jnp.zeros((1, d_model), jnp.float32),
        cmk=mix(), cmr=mix(),
        wkc=linear(d_model, d_ff), wrc=linear(d_model, d_model),
        wvc=linear(d_ff, d_model),
    )


# ----------------------------------------------------------------------------
# Pure-JAX f32 reference of the PyTorch forward (for correctness check)
# ----------------------------------------------------------------------------
def rwkv_block_reference(x, params, state=None):
    B, T, C = x.shape
    if state is None:
        state = jnp.zeros((B, C), x.dtype)

    def ln(z, g, b, eps=1e-5):
        m = jnp.mean(z, -1, keepdims=True)
        v = jnp.mean((z - m) ** 2, -1, keepdims=True)
        return (z - m) * jax.lax.rsqrt(v + eps) * g + b

    x_tm = ln(x, params["ln1_g"], params["ln1_b"])
    x_sh = jnp.concatenate([state[:, None, :], x_tm[:, :-1]], axis=1)
    tmk, tmv, tmr = params["tmk"], params["tmv"], params["tmr"]
    k = (x_tm * tmk + x_sh * (1 - tmk)) @ params["wk"]
    v = (x_tm * tmv + x_sh * (1 - tmv)) @ params["wv"]
    r = (x_tm * tmr + x_sh * (1 - tmr)) @ params["wr"]
    decay = jax.nn.sigmoid(k)
    recept = jax.nn.sigmoid(r)

    def step(carry, inp):
        d, vv = inp
        carry = d * carry + (1.0 - d) * vv
        return carry, carry

    _, s = jax.lax.scan(step, jnp.zeros((B, C), x.dtype),
                        (jnp.swapaxes(decay, 0, 1), jnp.swapaxes(v, 0, 1)))
    s = jnp.swapaxes(s, 0, 1)
    wkv = ln(recept * s + 0.1 * v, 1.0, 0.0)
    x = x + wkv @ params["wo"]

    x_cm = ln(x, params["ln2_g"], params["ln2_b"])
    x_sh_c = jnp.concatenate([state[:, None, :], x_cm[:, :-1]], axis=1)
    cmk, cmr = params["cmk"], params["cmr"]
    kc = (x_cm * cmk + x_sh_c * (1 - cmk)) @ params["wkc"]
    rc = (x_cm * cmr + x_sh_c * (1 - cmr)) @ params["wrc"]
    vk = jnp.square(jnp.maximum(kc, 0.0)) @ params["wvc"]
    x = x + jax.nn.sigmoid(rc) * vk
    return x, x[:, -1]


# ----------------------------------------------------------------------------
if __name__ == "__main__":
    B, T, d_model = 2, 16, 32          # d_ff = 4 * d_model = 128
    # NOTE: for real runs keep d_model a multiple of 128 (lane-dense tiles).

    key = jax.random.PRNGKey(0)
    pkey, xkey, skey = jax.random.split(key, 3)
    params = init_params(pkey, d_model)
    x = jax.random.normal(xkey, (B, T, d_model), dtype=jnp.float32)
    state = jax.random.normal(skey, (B, d_model), dtype=jnp.float32)

    fwd = jax.jit(rwkv_block_forward)

    # state=None path (matches the PyTorch default).
    y, ns = jax.block_until_ready(fwd(x, params))
    assert y.shape == (B, T, d_model) and y.dtype == jnp.float32
    assert ns.shape == (B, d_model)
    y_ref, ns_ref = rwkv_block_reference(x, params)
    # Tolerance is sized for bf16 matmul operands (f32 accumulation) vs an
    # all-f32 reference; the scan / layernorm paths themselves are f32.
    np.testing.assert_allclose(np.asarray(y), np.asarray(y_ref), rtol=2e-2, atol=2e-2)
    np.testing.assert_allclose(np.asarray(ns), np.asarray(ns_ref), rtol=2e-2, atol=2e-2)

    # Explicit non-zero token-shift state path.
    y2, ns2 = jax.block_until_ready(fwd(x, params, state))
    y2_ref, ns2_ref = rwkv_block_reference(x, params, state)
    np.testing.assert_allclose(np.asarray(y2), np.asarray(y2_ref), rtol=2e-2, atol=2e-2)
    np.testing.assert_allclose(np.asarray(ns2), np.asarray(ns2_ref), rtol=2e-2, atol=2e-2)

    print("KERNEL_OK")
</pallas_src>

<mosaic_0001>
module attributes {stable_mosaic.version = 11 : i64} {
  func.func @rwkv_block_kernel(%arg0: i32, %arg1: memref<32x32xf32, #tpu.memory_space<vmem>>, %arg2: memref<2x1x32xf32, #tpu.memory_space<vmem>>, %arg3: memref<4x32xf32, #tpu.memory_space<vmem>>, %arg4: memref<64x96xbf16, #tpu.memory_space<vmem>>, %arg5: memref<32x32xbf16, #tpu.memory_space<vmem>>, %arg6: memref<64x160xbf16, #tpu.memory_space<vmem>>, %arg7: memref<128x32xbf16, #tpu.memory_space<vmem>>, %arg8: memref<32x32xf32, #tpu.memory_space<vmem>>) attributes {dimension_semantics = [#tpu.dimension_semantics<parallel>], iteration_bounds = array<i64: 1>, scalar_prefetch = 0 : i64, scratch_operands = 0 : i64, tpu.core_type = #tpu.core_type<tc>, window_params = [{transform_indices = @transform_0, window_bounds = array<i64: 32, 32>}, {transform_indices = @transform_1, window_bounds = array<i64: 2, 1, 32>}, {pipeline_mode = #tpu.pipeline_mode<synchronous>, transform_indices = @transform_2, window_bounds = array<i64: 4, 32>}, {pipeline_mode = #tpu.pipeline_mode<synchronous>, transform_indices = @transform_3, window_bounds = array<i64: 64, 96>}, {pipeline_mode = #tpu.pipeline_mode<synchronous>, transform_indices = @transform_4, window_bounds = array<i64: 32, 32>}, {pipeline_mode = #tpu.pipeline_mode<synchronous>, transform_indices = @transform_5, window_bounds = array<i64: 64, 160>}, {pipeline_mode = #tpu.pipeline_mode<synchronous>, transform_indices = @transform_6, window_bounds = array<i64: 128, 32>}, {transform_indices = @transform_7, window_bounds = array<i64: 32, 32>}]} {
    %c0 = arith.constant 0 : index
    %c0_0 = arith.constant 0 : index
    %0 = vector.load %arg1[%c0, %c0_0] : memref<32x32xf32, #tpu.memory_space<vmem>>, vector<32x32xf32>
    %c0_1 = arith.constant 0 : index
    %c0_2 = arith.constant 0 : index
    %1 = vector.load %arg3[%c0_1, %c0_2] : memref<4x32xf32, #tpu.memory_space<vmem>>, vector<1x32xf32>
    %c1 = arith.constant 1 : index
    %c0_3 = arith.constant 0 : index
    %2 = vector.load %arg3[%c1, %c0_3] : memref<4x32xf32, #tpu.memory_space<vmem>>, vector<1x32xf32>
    %c2 = arith.constant 2 : index
    %c0_4 = arith.constant 0 : index
    %3 = vector.load %arg3[%c2, %c0_4] : memref<4x32xf32, #tpu.memory_space<vmem>>, vector<1x32xf32>
    %c3 = arith.constant 3 : index
    %c0_5 = arith.constant 0 : index
    %4 = vector.load %arg3[%c3, %c0_5] : memref<4x32xf32, #tpu.memory_space<vmem>>, vector<1x32xf32>
    %5 = tpu.iota {dimensions = array<i32: 0>} : vector<32x32xi32>
    %c16_i32 = arith.constant 16 : i32
    %c0_i32 = arith.constant 0 : i32
    %6 = arith.cmpi eq, %c16_i32, %c0_i32 : i32
    %c1_i32 = arith.constant 1 : i32
    %7 = arith.select %6, %c1_i32, %c16_i32 : i32
    %8 = vector.broadcast %7 : i32 to vector<32x32xi32>
    %9 = arith.remsi %5, %8 : vector<32x32xi32>
    %c0_i32_6 = arith.constant 0 : i32
    %10 = vector.broadcast %c0_i32_6 : i32 to vector<32x32xi32>
    %11 = arith.cmpi ne, %9, %10 : vector<32x32xi32>
    %c0_i32_7 = arith.constant 0 : i32
    %12 = vector.broadcast %c0_i32_7 : i32 to vector<32x32xi32>
    %13 = arith.cmpi slt, %9, %12 : vector<32x32xi32>
    %c0_i32_8 = arith.constant 0 : i32
    %14 = arith.cmpi slt, %7, %c0_i32_8 : i32
    %15 = vector.broadcast %14 : i1 to vector<32x32xi1>
    %16 = vector.broadcast %15 : vector<32x32xi1> to vector<32x32xi1>
    %17 = arith.xori %13, %16 : vector<32x32xi1>
    %18 = arith.andi %17, %11 : vector<32x32xi1>
    %19 = vector.broadcast %7 : i32 to vector<32x32xi32>
    %20 = arith.addi %9, %19 : vector<32x32xi32>
    %21 = arith.select %18, %20, %9 : vector<32x32xi1>, vector<32x32xi32>
    %c0_i32_9 = arith.constant 0 : i32
    %22 = vector.broadcast %c0_i32_9 : i32 to vector<32x32xi32>
    %23 = arith.cmpi eq, %21, %22 : vector<32x32xi32>
    %c0_10 = arith.constant 0 : index
    %c0_11 = arith.constant 0 : index
    %c0_12 = arith.constant 0 : index
    %24 = vector.load %arg2[%c0_10, %c0_11, %c0_12] : memref<2x1x32xf32, #tpu.memory_space<vmem>>, vector<1x1x32xf32>
    %25 = vector.shape_cast %24 : vector<1x1x32xf32> to vector<1x32xf32>
    %26 = vector.shape_cast %25 : vector<1x32xf32> to vector<1x32xf32>
    %27 = vector.broadcast %26 : vector<1x32xf32> to vector<16x32xf32>
    %c1_13 = arith.constant 1 : index
    %c0_14 = arith.constant 0 : index
    %c0_15 = arith.constant 0 : index
    %28 = vector.load %arg2[%c1_13, %c0_14, %c0_15] : memref<2x1x32xf32, #tpu.memory_space<vmem>>, vector<1x1x32xf32>
    %29 = vector.shape_cast %28 : vector<1x1x32xf32> to vector<1x32xf32>
    %30 = vector.shape_cast %29 : vector<1x32xf32> to vector<1x32xf32>
    %31 = vector.broadcast %30 : vector<1x32xf32> to vector<16x32xf32>
    %32 = tpu.concatenate %27, %31 in 0 : vector<16x32xf32>, vector<16x32xf32> -> vector<32x32xf32>
    %cst = arith.constant dense<0.000000e+00> : vector<32xf32>
    %33 = vector.multi_reduction <add>, %0, %cst [1] : vector<32x32xf32> to vector<32xf32>
    %34 = vector.shape_cast %33 : vector<32xf32> to vector<32x1xf32>
    %cst_16 = arith.constant 3.200000e+01 : f32
    %35 = vector.broadcast %cst_16 : f32 to vector<32x1xf32>
    %36 = arith.divf %34, %35 : vector<32x1xf32>
    %37 = vector.broadcast %36 : vector<32x1xf32> to vector<32x32xf32>
    %38 = arith.subf %0, %37 : vector<32x32xf32>
    %39 = arith.mulf %38, %38 : vector<32x32xf32>
    %cst_17 = arith.constant dense<0.000000e+00> : vector<32xf32>
    %40 = vector.multi_reduction <add>, %39, %cst_17 [1] : vector<32x32xf32> to vector<32xf32>
    %41 = vector.shape_cast %40 : vector<32xf32> to vector<32x1xf32>
    %cst_18 = arith.constant 3.200000e+01 : f32
    %42 = vector.broadcast %cst_18 : f32 to vector<32x1xf32>
    %43 = arith.divf %41, %42 : vector<32x1xf32>
    %cst_19 = arith.constant 9.99999974E-6 : f32
    %44 = vector.broadcast %cst_19 : f32 to vector<32x1xf32>
    %45 = arith.addf %43, %44 : vector<32x1xf32>
    %46 = math.rsqrt %45 : vector<32x1xf32>
    %47 = vector.broadcast %46 : vector<32x1xf32> to vector<32x32xf32>
    %48 = arith.mulf %38, %47 : vector<32x32xf32>
    %49 = vector.broadcast %1 : vector<1x32xf32> to vector<32x32xf32>
    %50 = arith.mulf %48, %49 : vector<32x32xf32>
    %51 = vector.broadcast %2 : vector<1x32xf32> to vector<32x32xf32>
    %52 = arith.addf %50, %51 : vector<32x32xf32>
    %c1_i32_20 = arith.constant 1 : i32
    %53 = tpu.dynamic_rotate %52 by %c1_i32_20 dim 0 : vector<32x32xf32>, i32 -> vector<32x32xf32>
    %54 = arith.select %23, %32, %53 : vector<32x32xi1>, vector<32x32xf32>
    %55 = tpu.concatenate %52, %54 in 1 : vector<32x32xf32>, vector<32x32xf32> -> vector<32x64xf32>
    %56 = arith.truncf %55 : vector<32x64xf32> to vector<32x64xbf16>
    %c0_21 = arith.constant 0 : index
    %c0_22 = arith.constant 0 : index
    %57 = vector.load %arg4[%c0_21, %c0_22] : memref<64x96xbf16, #tpu.memory_space<vmem>>, vector<64x96xbf16>
    %cst_23 = arith.constant dense<0.000000e+00> : vector<32x96xf32>
    %58 = tpu.matmul %56, %57, %cst_23 {dimension_numbers = #tpu.dot_dimension_numbers<[1], [0], [0], [1], [0, 0, 1, 1], [], []>} : vector<32x64xbf16>, vector<64x96xbf16>, vector<32x96xf32> -> vector<32x96xf32>
    %59 = vector.extract_strided_slice %58 {offsets = [0, 0], sizes = [32, 32], strides = [1, 1]} : vector<32x96xf32> to vector<32x32xf32>
    %60 = vector.extract_strided_slice %58 {offsets = [0, 32], sizes = [32, 32], strides = [1, 1]} : vector<32x96xf32> to vector<32x32xf32>
    %61 = vector.extract_strided_slice %58 {offsets = [0, 64], sizes = [32, 32], strides = [1, 1]} : vector<32x96xf32> to vector<32x32xf32>
    %62 = math.absf %59 : vector<32x32xf32>
    %cst_24 = arith.constant 0.000000e+00 : f32
    %63 = vector.broadcast %cst_24 : f32 to vector<32x32xf32>
    %64 = arith.subf %63, %62 : vector<32x32xf32>
    %65 = math.exp %64 : vector<32x32xf32>
    %cst_25 = arith.constant 0.000000e+00 : f32
    %66 = vector.broadcast %cst_25 : f32 to vector<32x32xf32>
    %67 = arith.cmpf oge, %59, %66 : vector<32x32xf32>
    %cst_26 = arith.constant 1.000000e+00 : f32
    %68 = vector.broadcast %cst_26 : f32 to vector<32x32xf32>
    %69 = arith.addf %68, %65 : vector<32x32xf32>
    %cst_27 = arith.constant 1.000000e+00 : f32
    %70 = vector.broadcast %cst_27 : f32 to vector<32x32xf32>
    %71 = arith.divf %70, %69 : vector<32x32xf32>
    %cst_28 = arith.constant 1.000000e+00 : f32
    %72 = vector.broadcast %cst_28 : f32 to vector<32x32xf32>
    %73 = arith.addf %72, %65 : vector<32x32xf32>
    %74 = arith.divf %65, %73 : vector<32x32xf32>
    %75 = arith.select %67, %71, %74 : vector<32x32xi1>, vector<32x32xf32>
    %76 = math.absf %61 : vector<32x32xf32>
    %cst_29 = arith.constant 0.000000e+00 : f32
    %77 = vector.broadcast %cst_29 : f32 to vector<32x32xf32>
    %78 = arith.subf %77, %76 : vector<32x32xf32>
    %79 = math.exp %78 : vector<32x32xf32>
    %cst_30 = arith.constant 0.000000e+00 : f32
    %80 = vector.broadcast %cst_30 : f32 to vector<32x32xf32>
    %81 = arith.cmpf oge, %61, %80 : vector<32x32xf32>
    %cst_31 = arith.constant 1.000000e+00 : f32
    %82 = vector.broadcast %cst_31 : f32 to vector<32x32xf32>
    %83 = arith.addf %82, %79 : vector<32x32xf32>
    %cst_32 = arith.constant 1.000000e+00 : f32
    %84 = vector.broadcast %cst_32 : f32 to vector<32x32xf32>
    %85 = arith.divf %84, %83 : vector<32x32xf32>
    %cst_33 = arith.constant 1.000000e+00 : f32
    %86 = vector.broadcast %cst_33 : f32 to vector<32x32xf32>
    %87 = arith.addf %86, %79 : vector<32x32xf32>
    %88 = arith.divf %79, %87 : vector<32x32xf32>
    %89 = arith.select %81, %85, %88 : vector<32x32xi1>, vector<32x32xf32>
    %cst_34 = arith.constant 1.000000e+00 : f32
    %90 = vector.broadcast %cst_34 : f32 to vector<32x32xf32>
    %91 = arith.subf %90, %75 : vector<32x32xf32>
    %92 = arith.mulf %91, %60 : vector<32x32xf32>
    %c1_i32_35 = arith.constant 1 : i32
    %93 = vector.broadcast %c1_i32_35 : i32 to vector<32x32xi32>
    %94 = arith.cmpi sge, %21, %93 : vector<32x32xi32>
    %c1_i32_36 = arith.constant 1 : i32
    %95 = tpu.dynamic_rotate %75 by %c1_i32_36 dim 0 : vector<32x32xf32>, i32 -> vector<32x32xf32>
    %c1_i32_37 = arith.constant 1 : i32
    %96 = tpu.dynamic_rotate %92 by %c1_i32_37 dim 0 : vector<32x32xf32>, i32 -> vector<32x32xf32>
    %97 = arith.mulf %75, %96 : vector<32x32xf32>
    %98 = arith.addf %97, %92 : vector<32x32xf32>
    %99 = arith.select %94, %98, %92 : vector<32x32xi1>, vector<32x32xf32>
    %100 = arith.mulf %75, %95 : vector<32x32xf32>
    %101 = arith.select %94, %100, %75 : vector<32x32xi1>, vector<32x32xf32>
    %c2_i32 = arith.constant 2 : i32
    %102 = vector.broadcast %c2_i32 : i32 to vector<32x32xi32>
    %103 = arith.cmpi sge, %21, %102 : vector<32x32xi32>
    %c2_i32_38 = arith.constant 2 : i32
    %104 = tpu.dynamic_rotate %101 by %c2_i32_38 dim 0 : vector<32x32xf32>, i32 -> vector<32x32xf32>
    %c2_i32_39 = arith.constant 2 : i32
    %105 = tpu.dynamic_rotate %99 by %c2_i32_39 dim 0 : vector<32x32xf32>, i32 -> vector<32x32xf32>
    %106 = arith.mulf %101, %105 : vector<32x32xf32>
    %107 = arith.addf %106, %99 : vector<32x32xf32>
    %108 = arith.select %103, %107, %99 : vector<32x32xi1>, vector<32x32xf32>
    %109 = arith.mulf %101, %104 : vector<32x32xf32>
    %110 = arith.select %103, %109, %101 : vector<32x32xi1>, vector<32x32xf32>
    %c4_i32 = arith.constant 4 : i32
    %111 = vector.broadcast %c4_i32 : i32 to vector<32x32xi32>
    %112 = arith.cmpi sge, %21, %111 : vector<32x32xi32>
    %c4_i32_40 = arith.constant 4 : i32
    %113 = tpu.dynamic_rotate %110 by %c4_i32_40 dim 0 : vector<32x32xf32>, i32 -> vector<32x32xf32>
    %c4_i32_41 = arith.constant 4 : i32
    %114 = tpu.dynamic_rotate %108 by %c4_i32_41 dim 0 : vector<32x32xf32>, i32 -> vector<32x32xf32>
    %115 = arith.mulf %110, %114 : vector<32x32xf32>
    %116 = arith.addf %115, %108 : vector<32x32xf32>
    %117 = arith.select %112, %116, %108 : vector<32x32xi1>, vector<32x32xf32>
    %118 = arith.mulf %110, %113 : vector<32x32xf32>
    %119 = arith.select %112, %118, %110 : vector<32x32xi1>, vector<32x32xf32>
    %c8_i32 = arith.constant 8 : i32
    %120 = vector.broadcast %c8_i32 : i32 to vector<32x32xi32>
    %121 = arith.cmpi sge, %21, %120 : vector<32x32xi32>
    %c8_i32_42 = arith.constant 8 : i32
    %122 = tpu.dynamic_rotate %117 by %c8_i32_42 dim 0 : vector<32x32xf32>, i32 -> vector<32x32xf32>
    %123 = arith.mulf %119, %122 : vector<32x32xf32>
    %124 = arith.addf %123, %117 : vector<32x32xf32>
    %125 = arith.select %121, %124, %117 : vector<32x32xi1>, vector<32x32xf32>
    %126 = arith.mulf %89, %125 : vector<32x32xf32>
    %cst_43 = arith.constant 1.000000e-01 : f32
    %127 = vector.broadcast %cst_43 : f32 to vector<32x32xf32>
    %128 = arith.mulf %127, %60 : vector<32x32xf32>
    %129 = arith.addf %126, %128 : vector<32x32xf32>
    %cst_44 = arith.constant dense<0.000000e+00> : vector<32xf32>
    %130 = vector.multi_reduction <add>, %129, %cst_44 [1] : vector<32x32xf32> to vector<32xf32>
    %131 = vector.shape_cast %130 : vector<32xf32> to vector<32x1xf32>
    %cst_45 = arith.constant 3.200000e+01 : f32
    %132 = vector.broadcast %cst_45 : f32 to vector<32x1xf32>
    %133 = arith.divf %131, %132 : vector<32x1xf32>
    %134 = vector.broadcast %133 : vector<32x1xf32> to vector<32x32xf32>
    %135 = arith.subf %129, %134 : vector<32x32xf32>
    %136 = arith.mulf %135, %135 : vector<32x32xf32>
    %cst_46 = arith.constant dense<0.000000e+00> : vector<32xf32>
    %137 = vector.multi_reduction <add>, %136, %cst_46 [1] : vector<32x32xf32> to vector<32xf32>
    %138 = vector.shape_cast %137 : vector<32xf32> to vector<32x1xf32>
    %cst_47 = arith.constant 3.200000e+01 : f32
    %139 = vector.broadcast %cst_47 : f32 to vector<32x1xf32>
    %140 = arith.divf %138, %139 : vector<32x1xf32>
    %cst_48 = arith.constant 9.99999974E-6 : f32
    %141 = vector.broadcast %cst_48 : f32 to vector<32x1xf32>
    %142 = arith.addf %140, %141 : vector<32x1xf32>
    %143 = math.rsqrt %142 : vector<32x1xf32>
    %144 = vector.broadcast %143 : vector<32x1xf32> to vector<32x32xf32>
    %145 = arith.mulf %135, %144 : vector<32x32xf32>
    %cst_49 = arith.constant 1.000000e+00 : f32
    %146 = vector.broadcast %cst_49 : f32 to vector<32x32xf32>
    %147 = arith.mulf %145, %146 : vector<32x32xf32>
    %cst_50 = arith.constant 0.000000e+00 : f32
    %148 = vector.broadcast %cst_50 : f32 to vector<32x32xf32>
    %149 = arith.addf %147, %148 : vector<32x32xf32>
    %150 = arith.truncf %149 : vector<32x32xf32> to vector<32x32xbf16>
    %c0_51 = arith.constant 0 : index
    %c0_52 = arith.constant 0 : index
    %151 = vector.load %arg5[%c0_51, %c0_52] : memref<32x32xbf16, #tpu.memory_space<vmem>>, vector<32x32xbf16>
    %cst_53 = arith.constant dense<0.000000e+00> : vector<32x32xf32>
    %152 = tpu.matmul %150, %151, %cst_53 {dimension_numbers = #tpu.dot_dimension_numbers<[1], [0], [0], [1], [0, 0, 1, 1], [], []>} : vector<32x32xbf16>, vector<32x32xbf16>, vector<32x32xf32> -> vector<32x32xf32>
    %153 = arith.addf %0, %152 : vector<32x32xf32>
    %cst_54 = arith.constant dense<0.000000e+00> : vector<32xf32>
    %154 = vector.multi_reduction <add>, %153, %cst_54 [1] : vector<32x32xf32> to vector<32xf32>
    %155 = vector.shape_cast %154 : vector<32xf32> to vector<32x1xf32>
    %cst_55 = arith.constant 3.200000e+01 : f32
    %156 = vector.broadcast %cst_55 : f32 to vector<32x1xf32>
    %157 = arith.divf %155, %156 : vector<32x1xf32>
    %158 = vector.broadcast %157 : vector<32x1xf32> to vector<32x32xf32>
    %159 = arith.subf %153, %158 : vector<32x32xf32>
    %160 = arith.mulf %159, %159 : vector<32x32xf32>
    %cst_56 = arith.constant dense<0.000000e+00> : vector<32xf32>
    %161 = vector.multi_reduction <add>, %160, %cst_56 [1] : vector<32x32xf32> to vector<32xf32>
    %162 = vector.shape_cast %161 : vector<32xf32> to vector<32x1xf32>
    %cst_57 = arith.constant 3.200000e+01 : f32
    %163 = vector.broadcast %cst_57 : f32 to vector<32x1xf32>
    %164 = arith.divf %162, %163 : vector<32x1xf32>
    %cst_58 = arith.constant 9.99999974E-6 : f32
    %165 = vector.broadcast %cst_58 : f32 to vector<32x1xf32>
    %166 = arith.addf %164, %165 : vector<32x1xf32>
    %167 = math.rsqrt %166 : vector<32x1xf32>
    %168 = vector.broadcast %167 : vector<32x1xf32> to vector<32x32xf32>
    %169 = arith.mulf %159, %168 : vector<32x32xf32>
    %170 = vector.broadcast %3 : vector<1x32xf32> to vector<32x32xf32>
    %171 = arith.mulf %169, %170 : vector<32x32xf32>
    %172 = vector.broadcast %4 : vector<1x32xf32> to vector<32x32xf32>
    %173 = arith.addf %171, %172 : vector<32x32xf32>
    %c1_i32_59 = arith.constant 1 : i32
    %174 = tpu.dynamic_rotate %173 by %c1_i32_59 dim 0 : vector<32x32xf32>, i32 -> vector<32x32xf32>
    %175 = arith.select %23, %32, %174 : vector<32x32xi1>, vector<32x32xf32>
    %176 = tpu.concatenate %173, %175 in 1 : vector<32x32xf32>, vector<32x32xf32> -> vector<32x64xf32>
    %177 = arith.truncf %176 : vector<32x64xf32> to vector<32x64xbf16>
    %c0_60 = arith.constant 0 : index
    %c0_61 = arith.constant 0 : index
    %178 = vector.load %arg6[%c0_60, %c0_61] : memref<64x160xbf16, #tpu.memory_space<vmem>>, vector<64x160xbf16>
    %cst_62 = arith.constant dense<0.000000e+00> : vector<32x160xf32>
    %179 = tpu.matmul %177, %178, %cst_62 {dimension_numbers = #tpu.dot_dimension_numbers<[1], [0], [0], [1], [0, 0, 1, 1], [], []>} : vector<32x64xbf16>, vector<64x160xbf16>, vector<32x160xf32> -> vector<32x160xf32>
    %180 = vector.extract_strided_slice %179 {offsets = [0, 0], sizes = [32, 128], strides = [1, 1]} : vector<32x160xf32> to vector<32x128xf32>
    %cst_63 = arith.constant 0.000000e+00 : f32
    %181 = vector.broadcast %cst_63 : f32 to vector<32x128xf32>
    %182 = arith.maximumf %180, %181 : vector<32x128xf32>
    %183 = vector.extract_strided_slice %179 {offsets = [0, 128], sizes = [32, 32], strides = [1, 1]} : vector<32x160xf32> to vector<32x32xf32>
    %184 = arith.mulf %182, %182 : vector<32x128xf32>
    %185 = arith.truncf %184 : vector<32x128xf32> to vector<32x128xbf16>
    %c0_64 = arith.constant 0 : index
    %c0_65 = arith.constant 0 : index
    %186 = vector.load %arg7[%c0_64, %c0_65] : memref<128x32xbf16, #tpu.memory_space<vmem>>, vector<128x32xbf16>
    %cst_66 = arith.constant dense<0.000000e+00> : vector<32x32xf32>
    %187 = tpu.matmul %185, %186, %cst_66 {dimension_numbers = #tpu.dot_dimension_numbers<[1], [0], [0], [1], [0, 0, 1, 1], [], []>} : vector<32x128xbf16>, vector<128x32xbf16>, vector<32x32xf32> -> vector<32x32xf32>
    %188 = math.absf %183 : vector<32x32xf32>
    %cst_67 = arith.constant 0.000000e+00 : f32
    %189 = vector.broadcast %cst_67 : f32 to vector<32x32xf32>
    %190 = arith.subf %189, %188 : vector<32x32xf32>
    %191 = math.exp %190 : vector<32x32xf32>
    %cst_68 = arith.constant 0.000000e+00 : f32
    %192 = vector.broadcast %cst_68 : f32 to vector<32x32xf32>
    %193 = arith.cmpf oge, %183, %192 : vector<32x32xf32>
    %cst_69 = arith.constant 1.000000e+00 : f32
    %194 = vector.broadcast %cst_69 : f32 to vector<32x32xf32>
    %195 = arith.addf %194, %191 : vector<32x32xf32>
    %cst_70 = arith.constant 1.000000e+00 : f32
    %196 = vector.broadcast %cst_70 : f32 to vector<32x32xf32>
    %197 = arith.divf %196, %195 : vector<32x32xf32>
    %cst_71 = arith.constant 1.000000e+00 : f32
    %198 = vector.broadcast %cst_71 : f32 to vector<32x32xf32>
    %199 = arith.addf %198, %191 : vector<32x32xf32>
    %200 = arith.divf %191, %199 : vector<32x32xf32>
    %201 = arith.select %193, %197, %200 : vector<32x32xi1>, vector<32x32xf32>
    %202 = arith.mulf %201, %187 : vector<32x32xf32>
    %203 = arith.addf %153, %202 : vector<32x32xf32>
    %c0_72 = arith.constant 0 : index
    %c0_73 = arith.constant 0 : index
    %204 = vector.load %arg8[%c0_72, %c0_73] : memref<32x32xf32, #tpu.memory_space<vmem>>, vector<32x32xf32>
    tpu.vector_store %arg8[%c0_72, %c0_73], %203 {strides = array<i32>} : memref<32x32xf32, #tpu.memory_space<vmem>>, vector<32x32xf32>,
    return
  }
  func.func @transform_0(%arg0: i32) -> (i32, i32) {
    %c0_i32 = arith.constant 0 : i32
    %c0_i32_0 = arith.constant 0 : i32
    return %arg0, %c0_i32 : i32, i32
  }
  func.func @transform_1(%arg0: i32) -> (i32, i32, i32) {
    %c0_i32 = arith.constant 0 : i32
    %c0_i32_0 = arith.constant 0 : i32
    %c0_i32_1 = arith.constant 0 : i32
    return %arg0, %c0_i32, %c0_i32_0 : i32, i32, i32
  }
  func.func @transform_2(%arg0: i32) -> (i32, i32) {
    %c0_i32 = arith.constant 0 : i32
    %c0_i32_0 = arith.constant 0 : i32
    %c0_i32_1 = arith.constant 0 : i32
    return %c0_i32, %c0_i32_0 : i32, i32
  }
  func.func @transform_3(%arg0: i32) -> (i32, i32) {
    %c0_i32 = arith.constant 0 : i32
    %c0_i32_0 = arith.constant 0 : i32
    %c0_i32_1 = arith.constant 0 : i32
    return %c0_i32, %c0_i32_0 : i32, i32
  }
  func.func @transform_4(%arg0: i32) -> (i32, i32) {
    %c0_i32 = arith.constant 0 : i32
    %c0_i32_0 = arith.constant 0 : i32
    %c0_i32_1 = arith.constant 0 : i32
    return %c0_i32, %c0_i32_0 : i32, i32
  }
  func.func @transform_5(%arg0: i32) -> (i32, i32) {
    %c0_i32 = arith.constant 0 : i32
    %c0_i32_0 = arith.constant 0 : i32
    %c0_i32_1 = arith.constant 0 : i32
    return %c0_i32, %c0_i32_0 : i32, i32
  }
  func.func @transform_6(%arg0: i32) -> (i32, i32) {
    %c0_i32 = arith.constant 0 : i32
    %c0_i32_0 = arith.constant 0 : i32
    %c0_i32_1 = arith.constant 0 : i32
    return %c0_i32, %c0_i32_0 : i32, i32
  }
  func.func @transform_7(%arg0: i32) -> (i32, i32) {
    %c0_i32 = arith.constant 0 : i32
    %c0_i32_0 = arith.constant 0 : i32
    return %arg0, %c0_i32 : i32, i32
  }
}

</mosaic_0001>

<llo_original>
// kernel: rwkv_block_forward.1
$region0: #{rwkv_block_forward.1}
  #allocation0 [shape = 'u32[]', space=smem, size = 0x4, offset = 0x4, fixed_abs, tag = 'smem constant byte address 0x4 - core index']
  #allocation1 [shape = 'u32[144,128]{1,0:T(1,128)}', space=vmem, size = 0x12000, scoped, tag = 'internal scratch']
  %s0 = inlined_call_operand.vmem [shape: f32[32,32], index: 0, kind: input, shape index: {}]
  %s1 = inlined_call_operand.vmem [shape: f32[2,1,32], index: 1, kind: input, shape index: {}]
  %s2 = inlined_call_operand.vmem [shape: f32[4,32], index: 2, kind: input, shape index: {}]
  %s3 = inlined_call_operand.vmem [shape: bf16[64,96], index: 3, kind: input, shape index: {}]
  %s4 = inlined_call_operand.vmem [shape: bf16[32,32], index: 4, kind: input, shape index: {}]
  %s5 = inlined_call_operand.vmem [shape: bf16[64,160], index: 5, kind: input, shape index: {}]
  %s6 = inlined_call_operand.vmem [shape: bf16[128,32], index: 6, kind: input, shape index: {}]
  %s7 = inlined_call_operand.vmem [shape: f32[32,32], index: 7, kind: output, shape index: {}]
  %s8 = sld [smem:[#allocation0]]
  $region38: #{rwkv_block_forward.1} parent=0
    _
  %s10 = ssub.s32 1, %s8
  %s11 = scalar_select 0, %s10, %s8
  // Predicated region
  $region2: #{rwkv_block_forward.1} parent=0 // pred_check
    _
  $region3: #{rwkv_block_forward.1} parent=0 // pred_check_branch
    %13 = sbr.rel (0) target = $region5
  $region4: #{rwkv_block_forward.1} parent=0 // pred_region
    _
  $region5: #{rwkv_block_forward.1} parent=0 // pred_fallthru
    _
  // Predicated region
  $region6: #{rwkv_block_forward.1} parent=0 // pred_check
    _
  $region7: #{rwkv_block_forward.1} parent=0 // pred_check_branch
    %15 = sbr.rel (0) target = $region9
  $region8: #{rwkv_block_forward.1} parent=0 // pred_region
    _
  $region9: #{rwkv_block_forward.1} parent=0 // pred_fallthru
    _
  // Predicated region
  $region10: #{rwkv_block_forward.1} parent=0 // pred_check
    _
  $region11: #{rwkv_block_forward.1} parent=0 // pred_check_branch
    %17 = sbr.rel (0) target = $region13
  $region12: #{rwkv_block_forward.1} parent=0 // pred_region
    _
  $region13: #{rwkv_block_forward.1} parent=0 // pred_fallthru
    _
  // Predicated region
  $region14: #{rwkv_block_forward.1} parent=0 // pred_check
    _
  $region15: #{rwkv_block_forward.1} parent=0 // pred_check_branch
    %19 = sbr.rel (0) target = $region17
  $region16: #{rwkv_block_forward.1} parent=0 // pred_region
    _
  $region17: #{rwkv_block_forward.1} parent=0 // pred_fallthru
    _
  // Predicated region
  $region18: #{rwkv_block_forward.1} parent=0 // pred_check
    _
  $region19: #{rwkv_block_forward.1} parent=0 // pred_check_branch
    %21 = sbr.rel (0) target = $region21
  $region20: #{rwkv_block_forward.1} parent=0 // pred_region
    _
  $region21: #{rwkv_block_forward.1} parent=0 // pred_fallthru
    _
  // Predicated region
  $region22: #{rwkv_block_forward.1} parent=0 // pred_check
    _
  $region23: #{rwkv_block_forward.1} parent=0 // pred_check_branch
    %23 = sbr.rel (0) target = $region25
  $region24: #{rwkv_block_forward.1} parent=0 // pred_region
    _
  $region25: #{rwkv_block_forward.1} parent=0 // pred_fallthru
    _
  // Predicated region
  $region26: #{rwkv_block_forward.1} parent=0 // pred_check
    _
  $region27: #{rwkv_block_forward.1} parent=0 // pred_check_branch
    %25 = sbr.rel (0) target = $region29
  $region28: #{rwkv_block_forward.1} parent=0 // pred_region
    _
  $region29: #{rwkv_block_forward.1} parent=0 // pred_fallthru
    _
  %v27 = vld [vmem:[%s0] sm:$0xff]
  %v28 = vld [vmem:[%s0 + $0x8] sm:$0xff]
  %v29 = vld [vmem:[%s0 + $0x10] sm:$0xff]
  %v30 = vld [vmem:[%s0 + $0x18] sm:$0xff]
  %v31 = vld [vmem:[%s2] sm:$0x1]
  %v32 = vld [vmem:[%s2 + $0x1] sm:$0x1]
  %v33 = vld [vmem:[%s2 + $0x2] sm:$0x1]
  %v34 = vld [vmem:[%s2 + $0x3] sm:$0x1]
  %v35 = vlaneseq
  %v36 = vshrl.u32 %v35, 7
  %v37 = vadd.s32 %v36, 8
  %v38 = vadd.s32 %v36, 16
  %v39 = vadd.s32 %v36, 24
  %vm40 = vcmp.lt.s32.totalorder %v36, 0
  %v41 = vsub.s32 0, %v36
  %v42 = vsel %vm40, %v41, %v36
  %v43 = vshrl.u32 %v42, 4
  %v44 = vand.u32 %v42, 15
  %v45 = vsub.s32 0, %v44
  %v46 = vsel %vm40, %v45, %v44
  %vm47 = vcmp.lt.s32.totalorder %v37, 0
  %v48 = vsub.s32 0, %v37
  %v49 = vsel %vm47, %v48, %v37
  %v50 = vshrl.u32 %v49, 4
  %v51 = vand.u32 %v49, 15
  %v52 = vsub.s32 0, %v51
  %v53 = vsel %vm47, %v52, %v51
  %vm54 = vcmp.lt.s32.totalorder %v38, 0
  %v55 = vsub.s32 0, %v38
  %v56 = vsel %vm54, %v55, %v38
  %v57 = vshrl.u32 %v56, 4
  %v58 = vand.u32 %v56, 15
  %v59 = vsub.s32 0, %v58
  %v60 = vsel %vm54, %v59, %v58
  %vm61 = vcmp.lt.s32.totalorder %v39, 0
  %v62 = vsub.s32 0, %v39
  %v63 = vsel %vm61, %v62, %v39
  %v64 = vshrl.u32 %v63, 4
  %v65 = vand.u32 %v63, 15
  %v66 = vsub.s32 0, %v65
  %v67 = vsel %vm61, %v66, %v65
  %vm68 = vcmp.ne.s32.totalorder %v46, 0
  %vm69 = vcmp.ne.s32.totalorder %v53, 0
  %vm70 = vcmp.ne.s32.totalorder %v60, 0
  %vm71 = vcmp.ne.s32.totalorder %v67, 0
  %vm72 = vcmp.lt.s32.totalorder %v46, 0
  %vm73 = vcmp.lt.s32.totalorder %v53, 0
  %vm74 = vcmp.lt.s32.totalorder %v60, 0
  %vm75 = vcmp.lt.s32.totalorder %v67, 0
  %vm76 = vmand %vm72, %vm68
  %vm77 = vmand %vm73, %vm69
  %vm78 = vmand %vm74, %vm70
  %vm79 = vmand %vm75, %vm71
  %v80 = vadd.s32 %v46, 16
  %v81 = vadd.s32 %v53, 16
  %v82 = vadd.s32 %v60, 16
  %v83 = vadd.s32 %v67, 16
  %v84 = vsel %vm76, %v80, %v46
  %v85 = vsel %vm77, %v81, %v53
  %v86 = vsel %vm78, %v82, %v60
  %v87 = vsel %vm79, %v83, %v67
  %vm88 = vcmp.eq.s32.totalorder %v84, 0
  %vm89 = vcmp.eq.s32.totalorder %v85, 0
  %vm90 = vcmp.eq.s32.totalorder %v86, 0
  %vm91 = vcmp.eq.s32.totalorder %v87, 0
  %v92 = vld [vmem:[%s1] sm:$0x1]
  %v94 = vlaneseq
  %v95 = vshrl.u32 %v94, 7
  %v96 = vsub.s32 0, %v95
  %v97 = vrot.slane %v92, %v96
  %s99 = scalar_lea.vmem %s1, 1
  %v100 = vld [vmem:[%s99] sm:$0x1]
  %v102 = vlaneseq
  %v103 = vshrl.u32 %v102, 7
  %v104 = vsub.s32 0, %v103
  %v105 = vrot.slane %v100, %v104
  %vm107 = vcmask 261120
  %v108 = vsel %vm107, %v27, 0.0
  %109 = vadd.xlane.f32.xlu0 %v108
  %v110 = vpop.xlane.xlu0 %109
  %v111 = vsel %vm107, %v28, 0.0
  %112 = vadd.xlane.f32.xlu0 %v111
  %v113 = vpop.xlane.xlu0 %112
  %v114 = vsel %vm107, %v29, 0.0
  %115 = vadd.xlane.f32.xlu0 %v114
  %v116 = vpop.xlane.xlu0 %115
  %v117 = vsel %vm107, %v30, 0.0
  %118 = vadd.xlane.f32.xlu0 %v117
  %v119 = vpop.xlane.xlu0 %118
  %v120 = vrcp.pop 32.0
  %v121 = vmul.f32 %v110, %v120
  %v122 = vmul.f32 %v113, %v120
  %v123 = vmul.f32 %v116, %v120
  %v124 = vmul.f32 %v119, %v120
  %v125 = vsub.f32 %v27, %v121
  %v126 = vsub.f32 %v28, %v122
  %v127 = vsub.f32 %v29, %v123
  %v128 = vsub.f32 %v30, %v124
  %v129 = vmul.f32 %v125, %v125
  %v130 = vmul.f32 %v126, %v126
  %v131 = vmul.f32 %v127, %v127
  %v132 = vmul.f32 %v128, %v128
  %v133 = vsel %vm107, %v129, 0.0
  %134 = vadd.xlane.f32.xlu0 %v133
  %v135 = vpop.xlane.xlu0 %134
  %v136 = vsel %vm107, %v130, 0.0
  %137 = vadd.xlane.f32.xlu0 %v136
  %v138 = vpop.xlane.xlu0 %137
  %v139 = vsel %vm107, %v131, 0.0
  %140 = vadd.xlane.f32.xlu0 %v139
  %v141 = vpop.xlane.xlu0 %140
  %v142 = vsel %vm107, %v132, 0.0
  %143 = vadd.xlane.f32.xlu0 %v142
  %v144 = vpop.xlane.xlu0 %143
  %v145 = vmul.f32 %v135, %v120
  %v146 = vmul.f32 %v138, %v120
  %v147 = vmul.f32 %v141, %v120
  %v148 = vmul.f32 %v144, %v120
  %v149 = vadd.f32 %v145, 1e-05
  %v150 = vadd.f32 %v146, 1e-05
  %v151 = vadd.f32 %v147, 1e-05
  %v152 = vadd.f32 %v148, 1e-05
  %v153 = vrsqrt.pop %v149
  %v154 = vrsqrt.pop %v150
  %v155 = vrsqrt.pop %v151
  %v156 = vrsqrt.pop %v152
  %v157 = vmul.f32 %v125, %v153
  %v158 = vmul.f32 %v126, %v154
  %v159 = vmul.f32 %v127, %v155
  %v160 = vmul.f32 %v128, %v156
  %v161 = vlaneseq
  %v162 = vshrl.u32 %v161, 7
  %v163 = vsub.s32 0, %v162
  %v164 = vrot.slane %v31, %v163
  %v165 = vmul.f32 %v157, %v164
  %v166 = vmul.f32 %v158, %v164
  %v167 = vmul.f32 %v159, %v164
  %v168 = vmul.f32 %v160, %v164
  %v169 = vlaneseq
  %v170 = vshrl.u32 %v169, 7
  %v171 = vsub.s32 0, %v170
  %v172 = vrot.slane %v32, %v171
  %v173 = vadd.f32 %v165, %v172
  %v174 = vadd.f32 %v166, %v172
  %v175 = vadd.f32 %v167, %v172
  %v176 = vadd.f32 %v168, %v172
  %v177 = vrot.slane %v173, 7
  %v178 = vrot.slane %v174, 7
  %v179 = vrot.slane %v175, 7
  %v180 = vrot.slane %v176, 7
  %vm181 = vcmp.lt.s32.totalorder %v36, 1
  %v182 = vsel %vm181, %v179, %v180
  %v183 = vsel %vm181, %v178, %v179
  %v184 = vsel %vm181, %v177, %v178
  %v185 = vsel %vm181, %v180, %v177
  %v186 = vsel %vm88, %v97, %v185
  %v187 = vsel %vm89, %v97, %v184
  %v188 = vsel %vm90, %v105, %v183
  %v189 = vsel %vm91, %v105, %v182
  %194 = vrot.lane.b32.xlu0 %v186, 32
  %v195 = vpop.permute.xlu0 %194
  %196 = vrot.lane.b32.xlu0 %v187, 32
  %v197 = vpop.permute.xlu0 %196
  %198 = vrot.lane.b32.xlu0 %v188, 32
  %v199 = vpop.permute.xlu0 %198
  %200 = vrot.lane.b32.xlu0 %v189, 32
  %v201 = vpop.permute.xlu0 %200
  %v206 = vsel %vm107, %v173, %v195
  %v207 = vsel %vm107, %v174, %v197
  %v208 = vsel %vm107, %v175, %v199
  %v209 = vsel %vm107, %v176, %v201
  %v210 = vpack.c.bf16 %v207, %v206
  %v211 = vpack.c.bf16 %v209, %v208
  %v212 = vld [vmem:[%s3] sm:$0xf]
  %v213 = vld [vmem:[%s3 + $0x4] sm:$0xf]
  %v214 = vld [vmem:[%s3 + $0x8] sm:$0xf]
  %v215 = vld [vmem:[%s3 + $0xc] sm:$0xf]
  %v216 = vld [vmem:[%s3 + $0x10] sm:$0xf]
  %v217 = vld [vmem:[%s3 + $0x14] sm:$0xf]
  %v218 = vld [vmem:[%s3 + $0x18] sm:$0xf]
  %v219 = vld [vmem:[%s3 + $0x1c] sm:$0xf]
  %v228 = vunpack.c.l.b16 %v212
  %v229 = vunpack.c.l.b16 %v213
  %v230 = vunpack.c.l.b16 %v214
  %v231 = vunpack.c.l.b16 %v215
  %v232 = vunpack.c.l.b16 %v216
  %v233 = vunpack.c.l.b16 %v217
  %v234 = vunpack.c.l.b16 %v218
  %v235 = vunpack.c.l.b16 %v219
  %v236 = vpack.c.b16 %v229, %v228
  %v237 = vpack.c.b16 %v231, %v230
  %v238 = vpack.c.b16 %v233, %v232
  %v239 = vpack.c.b16 %v235, %v234
  %vm244 = vcmask 523264
  %v246 = vsel %vm244, %v210, 0
  %v249 = vsel %vm244, %v211, 0
  %251 = vmatprep.subr.bf16.mxu0 0
  %252 = vmatpush1.bf16.msra.mxu0 0
  %253 = vmatprep.subr.bf16.mxu0 0
  %254 = vmatpush1.bf16.msra.mxu0 0
  %255 = vmatprep.subr.bf16.mxu0 0
  %256 = vmatpush1.bf16.msra.mxu0 0
  %257 = vmatprep.subr.bf16.mxu0 0
  %258 = vmatpush1.bf16.msra.mxu0 0
  %259 = vmatprep.subr.bf16.mxu0 0
  %260 = vmatpush1.bf16.msra.mxu0 %v239
  %261 = vmatprep.subr.bf16.mxu0 0
  %262 = vmatpush1.bf16.msra.mxu0 %v238
  %263 = vmatprep.subr.bf16.mxu0 0
  %264 = vmatpush1.bf16.msra.mxu0 %v237
  %265 = vmatprep.subr.bf16.mxu0 0
  %266 = vmatpush1.bf16.msra.mxu0 %v236
  %267 = vmatprep.subr.bf16.mxu0 0
  %268 = vmatpush2.bf16.msra.mxu0 0
  %269 = vmatprep.subr.bf16.mxu0 0
  %270 = vmatpush2.bf16.msra.mxu0 0
  %271 = vmatprep.subr.bf16.mxu0 0
  %272 = vmatpush2.bf16.msra.mxu0 0
  %273 = vmatprep.subr.bf16.mxu0 0
  %274 = vmatpush2.bf16.msra.mxu0 0
  %275 = vmatprep.subr.bf16.mxu0 0
  %276 = vmatpush2.bf16.msra.mxu0 0
  %277 = vmatprep.subr.bf16.mxu0 0
  %278 = vmatpush2.bf16.msra.mxu0 0
  %279 = vmatprep.subr.bf16.mxu0 0
  %280 = vmatpush2.bf16.msra.mxu0 0
  %281 = vmatprep.subr.bf16.mxu0 0
  %282 = vmatpush2.bf16.msra.mxu0 0
  %283 = vmatprep.mubr.bf16.mxu0 0
  %284 = vmatmul.mubr.bf16.gmra.mxu0 %v246
  %v285 = vpop.f32.mrf.mxu0
  %v286 = vadd.f32 0.0, %v285
  %v287 = vpop.f32.mrf.mxu0
  %v288 = vpop.f32.mrf.mxu0
  %v289 = vadd.f32 0.0, %v288
  %v290 = vpop.f32.mrf.mxu0
  %291 = vmatprep.mubr.bf16.mxu0 0
  %292 = vmatmul.mubr.bf16.gmra.mxu0 %v249
  %v293 = vpop.f32.mrf.mxu0
  %v294 = vadd.f32 0.0, %v293
  %v295 = vpop.f32.mrf.mxu0
  %v296 = vpop.f32.mrf.mxu0
  %v297 = vadd.f32 0.0, %v296
  %v298 = vpop.f32.mrf.mxu0
  %299 = vdwg.mxu0
  %v300 = vand.u32 2147483647, %v286
  %v301 = vand.u32 2147483647, %v289
  %v302 = vand.u32 2147483647, %v294
  %v303 = vand.u32 2147483647, %v297
  %v304 = vsub.f32 0.0, %v300
  %v305 = vsub.f32 0.0, %v301
  %v306 = vsub.f32 0.0, %v302
  %v307 = vsub.f32 0.0, %v303
  %v308 = vmul.f32 %v304, 1.442695
  %v309 = vpow.pop %v308
  %v310 = vmul.f32 %v305, 1.442695
  %v311 = vpow.pop %v310
  %v312 = vmul.f32 %v306, 1.442695
  %v313 = vpow.pop %v312
  %v314 = vmul.f32 %v307, 1.442695
  %v315 = vpow.pop %v314
  %vm316 = vcmp.ge.f32.partialorder %v286, 0.0
  %vm317 = vcmp.ge.f32.partialorder %v289, 0.0
  %vm318 = vcmp.ge.f32.partialorder %v294, 0.0
  %vm319 = vcmp.ge.f32.partialorder %v297, 0.0
  %v320 = vadd.f32 %v309, 1.0
  %v321 = vadd.f32 %v311, 1.0
  %v322 = vadd.f32 %v313, 1.0
  %v323 = vadd.f32 %v315, 1.0
  %v324 = vrcp.pop %v320
  %v325 = vmul.f32 1.0, %v324
  %v326 = vrcp.pop %v321
  %v327 = vmul.f32 1.0, %v326
  %v328 = vrcp.pop %v322
  %v329 = vmul.f32 1.0, %v328
  %v330 = vrcp.pop %v323
  %v331 = vmul.f32 1.0, %v330
  %v332 = vmul.f32 %v309, %v324
  %v333 = vmul.f32 %v311, %v326
  %v334 = vmul.f32 %v313, %v328
  %v335 = vmul.f32 %v315, %v330
  %v336 = vsel %vm316, %v325, %v332
  %v337 = vsel %vm317, %v327, %v333
  %v338 = vsel %vm318, %v329, %v334
  %v339 = vsel %vm319, %v331, %v335
  %v340 = vsub.f32 1.0, %v336
  %v341 = vsub.f32 1.0, %v337
  %v342 = vsub.f32 1.0, %v338
  %v343 = vsub.f32 1.0, %v339
  %348 = vrot.lane.b32.xlu0 %v286, 96
  %v349 = vpop.permute.xlu0 %348
  %350 = vrot.lane.b32.xlu0 %v289, 96
  %v351 = vpop.permute.xlu0 %350
  %352 = vrot.lane.b32.xlu0 %v294, 96
  %v353 = vpop.permute.xlu0 %352
  %354 = vrot.lane.b32.xlu0 %v297, 96
  %v355 = vpop.permute.xlu0 %354
  %v360 = vmul.f32 %v340, %v349
  %v361 = vmul.f32 %v341, %v351
  %v362 = vmul.f32 %v342, %v353
  %v363 = vmul.f32 %v343, %v355
  %vm364 = vcmp.ge.s32.totalorder %v84, 1
  %vm365 = vcmp.ge.s32.totalorder %v85, 1
  %vm366 = vcmp.ge.s32.totalorder %v86, 1
  %vm367 = vcmp.ge.s32.totalorder %v87, 1
  %v368 = vrot.slane %v336, 7
  %v369 = vrot.slane %v337, 7
  %v370 = vrot.slane %v338, 7
  %v371 = vrot.slane %v339, 7
  %v372 = vsel %vm181, %v370, %v371
  %v373 = vsel %vm181, %v369, %v370
  %v374 = vsel %vm181, %v368, %v369
  %v375 = vsel %vm181, %v371, %v368
  %v376 = vrot.slane %v360, 7
  %v377 = vrot.slane %v361, 7
  %v378 = vrot.slane %v362, 7
  %v379 = vrot.slane %v363, 7
  %v380 = vsel %vm181, %v378, %v379
  %v381 = vsel %vm181, %v377, %v378
  %v382 = vsel %vm181, %v376, %v377
  %v383 = vsel %vm181, %v379, %v376
  %v384 = vmul.f32 %v336, %v383
  %v385 = vmul.f32 %v337, %v382
  %v386 = vmul.f32 %v338, %v381
  %v387 = vmul.f32 %v339, %v380
  %v388 = vadd.f32 %v384, %v360
  %v389 = vadd.f32 %v385, %v361
  %v390 = vadd.f32 %v386, %v362
  %v391 = vadd.f32 %v387, %v363
  %v392 = vsel %vm364, %v388, %v360
  %v393 = vsel %vm365, %v389, %v361
  %v394 = vsel %vm366, %v390, %v362
  %v395 = vsel %vm367, %v391, %v363
  %v396 = vmul.f32 %v336, %v375
  %v397 = vmul.f32 %v337, %v374
  %v398 = vmul.f32 %v338, %v373
  %v399 = vmul.f32 %v339, %v372
  %v400 = vsel %vm364, %v396, %v336
  %v401 = vsel %vm365, %v397, %v337
  %v402 = vsel %vm366, %v398, %v338
  %v403 = vsel %vm367, %v399, %v339
  %vm404 = vcmp.ge.s32.totalorder %v84, 2
  %vm405 = vcmp.ge.s32.totalorder %v85, 2
  %vm406 = vcmp.ge.s32.totalorder %v86, 2
  %vm407 = vcmp.ge.s32.totalorder %v87, 2
  %v408 = vrot.slane %v400, 6
  %v409 = vrot.slane %v401, 6
  %v410 = vrot.slane %v402, 6
  %v411 = vrot.slane %v403, 6
  %vm412 = vcmp.lt.s32.totalorder %v36, 2
  %v413 = vsel %vm412, %v410, %v411
  %v414 = vsel %vm412, %v409, %v410
  %v415 = vsel %vm412, %v408, %v409
  %v416 = vsel %vm412, %v411, %v408
  %v417 = vrot.slane %v392, 6
  %v418 = vrot.slane %v393, 6
  %v419 = vrot.slane %v394, 6
  %v420 = vrot.slane %v395, 6
  %v421 = vsel %vm412, %v419, %v420
  %v422 = vsel %vm412, %v418, %v419
  %v423 = vsel %vm412, %v417, %v418
  %v424 = vsel %vm412, %v420, %v417
  %v425 = vmul.f32 %v400, %v424
  %v426 = vmul.f32 %v401, %v423
  %v427 = vmul.f32 %v402, %v422
  %v428 = vmul.f32 %v403, %v421
  %v429 = vadd.f32 %v425, %v392
  %v430 = vadd.f32 %v426, %v393
  %v431 = vadd.f32 %v427, %v394
  %v432 = vadd.f32 %v428, %v395
  %v433 = vsel %vm404, %v429, %v392
  %v434 = vsel %vm405, %v430, %v393
  %v435 = vsel %vm406, %v431, %v394
  %v436 = vsel %vm407, %v432, %v395
  %v437 = vmul.f32 %v400, %v416
  %v438 = vmul.f32 %v401, %v415
  %v439 = vmul.f32 %v402, %v414
  %v440 = vmul.f32 %v403, %v413
  %v441 = vsel %vm404, %v437, %v400
  %v442 = vsel %vm405, %v438, %v401
  %v443 = vsel %vm406, %v439, %v402
  %v444 = vsel %vm407, %v440, %v403
  %vm445 = vcmp.ge.s32.totalorder %v84, 4
  %vm446 = vcmp.ge.s32.totalorder %v85, 4
  %vm447 = vcmp.ge.s32.totalorder %v86, 4
  %vm448 = vcmp.ge.s32.totalorder %v87, 4
  %v449 = vrot.slane %v441, 4
  %v450 = vrot.slane %v442, 4
  %v451 = vrot.slane %v443, 4
  %v452 = vrot.slane %v444, 4
  %vm453 = vcmp.lt.s32.totalorder %v36, 4
  %v454 = vsel %vm453, %v451, %v452
  %v455 = vsel %vm453, %v450, %v451
  %v456 = vsel %vm453, %v449, %v450
  %v457 = vsel %vm453, %v452, %v449
  %v458 = vrot.slane %v433, 4
  %v459 = vrot.slane %v434, 4
  %v460 = vrot.slane %v435, 4
  %v461 = vrot.slane %v436, 4
  %v462 = vsel %vm453, %v460, %v461
  %v463 = vsel %vm453, %v459, %v460
  %v464 = vsel %vm453, %v458, %v459
  %v465 = vsel %vm453, %v461, %v458
  %v466 = vmul.f32 %v441, %v465
  %v467 = vmul.f32 %v442, %v464
  %v468 = vmul.f32 %v443, %v463
  %v469 = vmul.f32 %v444, %v462
  %v470 = vadd.f32 %v466, %v433
  %v471 = vadd.f32 %v467, %v434
  %v472 = vadd.f32 %v468, %v435
  %v473 = vadd.f32 %v469, %v436
  %v474 = vsel %vm445, %v470, %v433
  %v475 = vsel %vm446, %v471, %v434
  %v476 = vsel %vm447, %v472, %v435
  %v477 = vsel %vm448, %v473, %v436
  %v478 = vmul.f32 %v441, %v457
  %v479 = vmul.f32 %v442, %v456
  %v480 = vmul.f32 %v443, %v455
  %v481 = vmul.f32 %v444, %v454
  %v482 = vsel %vm445, %v478, %v441
  %v483 = vsel %vm446, %v479, %v442
  %v484 = vsel %vm447, %v480, %v443
  %v485 = vsel %vm448, %v481, %v444
  %vm486 = vcmp.ge.s32.totalorder %v84, 8
  %vm487 = vcmp.ge.s32.totalorder %v85, 8
  %vm488 = vcmp.ge.s32.totalorder %v86, 8
  %vm489 = vcmp.ge.s32.totalorder %v87, 8
  %v490 = vmul.f32 %v482, %v477
  %v491 = vmul.f32 %v483, %v474
  %v492 = vmul.f32 %v484, %v475
  %v493 = vmul.f32 %v485, %v476
  %v494 = vadd.f32 %v490, %v474
  %v495 = vadd.f32 %v491, %v475
  %v496 = vadd.f32 %v492, %v476
  %v497 = vadd.f32 %v493, %v477
  %v498 = vsel %vm486, %v494, %v474
  %v499 = vsel %vm487, %v495, %v475
  %v500 = vsel %vm488, %v496, %v476
  %v501 = vsel %vm489, %v497, %v477
  %506 = vrot.lane.b32.xlu0 %v498, 64
  %v507 = vpop.permute.xlu0 %506
  %508 = vrot.lane.b32.xlu0 %v499, 64
  %v509 = vpop.permute.xlu0 %508
  %510 = vrot.lane.b32.xlu0 %v500, 64
  %v511 = vpop.permute.xlu0 %510
  %512 = vrot.lane.b32.xlu0 %v501, 64
  %v513 = vpop.permute.xlu0 %512
  %v518 = vmul.f32 %v336, %v507
  %v519 = vmul.f32 %v337, %v509
  %v520 = vmul.f32 %v338, %v511
  %v521 = vmul.f32 %v339, %v513
  %v522 = vmul.f32 %v286, 0.1
  %v523 = vmul.f32 %v289, 0.1
  %v524 = vmul.f32 %v294, 0.1
  %v525 = vmul.f32 %v297, 0.1
  %530 = vrot.lane.b32.xlu0 %v522, 32
  %v531 = vpop.permute.xlu0 %530
  %532 = vrot.lane.b32.xlu0 %v523, 32
  %v533 = vpop.permute.xlu0 %532
  %534 = vrot.lane.b32.xlu0 %v524, 32
  %v535 = vpop.permute.xlu0 %534
  %536 = vrot.lane.b32.xlu0 %v525, 32
  %v537 = vpop.permute.xlu0 %536
  %v542 = vadd.f32 %v518, %v531
  %v543 = vadd.f32 %v519, %v533
  %v544 = vadd.f32 %v520, %v535
  %v545 = vadd.f32 %v521, %v537
  %550 = vrot.lane.b32.xlu0 %v542, 64
  %v551 = vpop.permute.xlu0 %550
  %552 = vrot.lane.b32.xlu0 %v543, 64
  %v553 = vpop.permute.xlu0 %552
  %554 = vrot.lane.b32.xlu0 %v544, 64
  %v555 = vpop.permute.xlu0 %554
  %556 = vrot.lane.b32.xlu0 %v545, 64
  %v557 = vpop.permute.xlu0 %556
  %v562 = vsel %vm107, %v551, 0.0
  %563 = vadd.xlane.f32.xlu0 %v562
  %v564 = vpop.xlane.xlu0 %563
  %v565 = vsel %vm107, %v553, 0.0
  %566 = vadd.xlane.f32.xlu0 %v565
  %v567 = vpop.xlane.xlu0 %566
  %v568 = vsel %vm107, %v555, 0.0
  %569 = vadd.xlane.f32.xlu0 %v568
  %v570 = vpop.xlane.xlu0 %569
  %v571 = vsel %vm107, %v557, 0.0
  %572 = vadd.xlane.f32.xlu0 %v571
  %v573 = vpop.xlane.xlu0 %572
  %v574 = vmul.f32 %v564, %v120
  %v575 = vmul.f32 %v567, %v120
  %v576 = vmul.f32 %v570, %v120
  %v577 = vmul.f32 %v573, %v120
  %v578 = vsub.f32 %v542, %v574
  %v579 = vsub.f32 %v543, %v575
  %v580 = vsub.f32 %v544, %v576
  %v581 = vsub.f32 %v545, %v577
  %v582 = vmul.f32 %v578, %v578
  %v583 = vmul.f32 %v579, %v579
  %v584 = vmul.f32 %v580, %v580
  %v585 = vmul.f32 %v581, %v581
  %590 = vrot.lane.b32.xlu0 %v582, 64
  %v591 = vpop.permute.xlu0 %590
  %592 = vrot.lane.b32.xlu0 %v583, 64
  %v593 = vpop.permute.xlu0 %592
  %594 = vrot.lane.b32.xlu0 %v584, 64
  %v595 = vpop.permute.xlu0 %594
  %596 = vrot.lane.b32.xlu0 %v585, 64
  %v597 = vpop.permute.xlu0 %596
  %v602 = vsel %vm107, %v591, 0.0
  %603 = vadd.xlane.f32.xlu0 %v602
  %v604 = vpop.xlane.xlu0 %603
  %v605 = vsel %vm107, %v593, 0.0
  %606 = vadd.xlane.f32.xlu0 %v605
  %v607 = vpop.xlane.xlu0 %606
  %v608 = vsel %vm107, %v595, 0.0
  %609 = vadd.xlane.f32.xlu0 %v608
  %v610 = vpop.xlane.xlu0 %609
  %v611 = vsel %vm107, %v597, 0.0
  %612 = vadd.xlane.f32.xlu0 %v611
  %v613 = vpop.xlane.xlu0 %612
  %v614 = vmul.f32 %v604, %v120
  %v615 = vmul.f32 %v607, %v120
  %v616 = vmul.f32 %v610, %v120
  %v617 = vmul.f32 %v613, %v120
  %v618 = vadd.f32 %v614, 1e-05
  %v619 = vadd.f32 %v615, 1e-05
  %v620 = vadd.f32 %v616, 1e-05
  %v621 = vadd.f32 %v617, 1e-05
  %v622 = vrsqrt.pop %v618
  %v623 = vrsqrt.pop %v619
  %v624 = vrsqrt.pop %v620
  %v625 = vrsqrt.pop %v621
  %v626 = vmul.f32 %v578, %v622
  %v627 = vmul.f32 %v579, %v623
  %v628 = vmul.f32 %v580, %v624
  %v629 = vmul.f32 %v581, %v625
  %v630 = vadd.f32 %v626, 0.0
  %v631 = vadd.f32 %v627, 0.0
  %v632 = vadd.f32 %v628, 0.0
  %v633 = vadd.f32 %v629, 0.0
  %v634 = vpack.c.bf16 %v631, %v630
  %v635 = vpack.c.bf16 %v633, %v632
  %v636 = vld [vmem:[%s4] sm:$0xf]
  %v637 = vld [vmem:[%s4 + $0x4] sm:$0xf]
  %v638 = vld [vmem:[%s4 + $0x8] sm:$0xf]
  %v639 = vld [vmem:[%s4 + $0xc] sm:$0xf]
  %642 = vrot.lane.b32.xlu0 %v634, 64
  %v643 = vpop.permute.xlu0 %642
  %644 = vrot.lane.b32.xlu0 %v635, 64
  %v645 = vpop.permute.xlu0 %644
  %v650 = vunpack.c.l.b16 %v636
  %v651 = vunpack.c.l.b16 %v637
  %v652 = vunpack.c.l.b16 %v638
  %v653 = vunpack.c.l.b16 %v639
  %v654 = vpack.c.b16 %v651, %v650
  %v655 = vpack.c.b16 %v653, %v652
  %v659 = vsel %vm107, %v643, 0
  %v662 = vsel %vm107, %v645, 0
  %664 = vmatprep.subr.bf16.mxu0 0
  %665 = vmatpush1.bf16.msra.mxu0 0
  %666 = vmatprep.subr.bf16.mxu0 0
  %667 = vmatpush1.bf16.msra.mxu0 0
  %668 = vmatprep.subr.bf16.mxu0 0
  %669 = vmatpush1.bf16.msra.mxu0 0
  %670 = vmatprep.subr.bf16.mxu0 0
  %671 = vmatpush1.bf16.msra.mxu0 0
  %672 = vmatprep.subr.bf16.mxu0 0
  %673 = vmatpush1.bf16.msra.mxu0 0
  %674 = vmatprep.subr.bf16.mxu0 0
  %675 = vmatpush1.bf16.msra.mxu0 0
  %676 = vmatprep.subr.bf16.mxu0 0
  %677 = vmatpush1.bf16.msra.mxu0 %v655
  %678 = vmatprep.subr.bf16.mxu0 0
  %679 = vmatpush1.bf16.msra.mxu0 %v654
  %680 = vmatprep.subr.bf16.mxu0 0
  %681 = vmatpush2.bf16.msra.mxu0 0
  %682 = vmatprep.subr.bf16.mxu0 0
  %683 = vmatpush2.bf16.msra.mxu0 0
  %684 = vmatprep.subr.bf16.mxu0 0
  %685 = vmatpush2.bf16.msra.mxu0 0
  %686 = vmatprep.subr.bf16.mxu0 0
  %687 = vmatpush2.bf16.msra.mxu0 0
  %688 = vmatprep.subr.bf16.mxu0 0
  %689 = vmatpush2.bf16.msra.mxu0 0
  %690 = vmatprep.subr.bf16.mxu0 0
  %691 = vmatpush2.bf16.msra.mxu0 0
  %692 = vmatprep.subr.bf16.mxu0 0
  %693 = vmatpush2.bf16.msra.mxu0 0
  %694 = vmatprep.subr.bf16.mxu0 0
  %695 = vmatpush2.bf16.msra.mxu0 0
  %696 = vmatprep.mubr.bf16.mxu0 0
  %697 = vmatmul.mubr.bf16.gmra.mxu0 %v659
  %v698 = vpop.f32.mrf.mxu0
  %v699 = vadd.f32 0.0, %v698
  %v700 = vpop.f32.mrf.mxu0
  %v701 = vpop.f32.mrf.mxu0
  %v702 = vadd.f32 0.0, %v701
  %v703 = vpop.f32.mrf.mxu0
  %704 = vmatprep.mubr.bf16.mxu0 0
  %705 = vmatmul.mubr.bf16.gmra.mxu0 %v662
  %v706 = vpop.f32.mrf.mxu0
  %v707 = vadd.f32 0.0, %v706
  %v708 = vpop.f32.mrf.mxu0
  %v709 = vpop.f32.mrf.mxu0
  %v710 = vadd.f32 0.0, %v709
  %v711 = vpop.f32.mrf.mxu0
  %712 = vdwg.mxu0
  %v713 = vadd.f32 %v27, %v699
  %v714 = vadd.f32 %v28, %v702
  %v715 = vadd.f32 %v29, %v707
  %v716 = vadd.f32 %v30, %v710
  %v717 = vsel %vm107, %v713, 0.0
  %718 = vadd.xlane.f32.xlu0 %v717
  %v719 = vpop.xlane.xlu0 %718
  %v720 = vsel %vm107, %v714, 0.0
  %721 = vadd.xlane.f32.xlu0 %v720
  %v722 = vpop.xlane.xlu0 %721
  %v723 = vsel %vm107, %v715, 0.0
  %724 = vadd.xlane.f32.xlu0 %v723
  %v725 = vpop.xlane.xlu0 %724
  %v726 = vsel %vm107, %v716, 0.0
  %727 = vadd.xlane.f32.xlu0 %v726
  %v728 = vpop.xlane.xlu0 %727
  %v729 = vmul.f32 %v719, %v120
  %v730 = vmul.f32 %v722, %v120
  %v731 = vmul.f32 %v725, %v120
  %v732 = vmul.f32 %v728, %v120
  %v733 = vsub.f32 %v713, %v729
  %v734 = vsub.f32 %v714, %v730
  %v735 = vsub.f32 %v715, %v731
  %v736 = vsub.f32 %v716, %v732
  %v737 = vmul.f32 %v733, %v733
  %v738 = vmul.f32 %v734, %v734
  %v739 = vmul.f32 %v735, %v735
  %v740 = vmul.f32 %v736, %v736
  %v741 = vsel %vm107, %v737, 0.0
  %742 = vadd.xlane.f32.xlu0 %v741
  %v743 = vpop.xlane.xlu0 %742
  %v744 = vsel %vm107, %v738, 0.0
  %745 = vadd.xlane.f32.xlu0 %v744
  %v746 = vpop.xlane.xlu0 %745
  %v747 = vsel %vm107, %v739, 0.0
  %748 = vadd.xlane.f32.xlu0 %v747
  %v749 = vpop.xlane.xlu0 %748
  %v750 = vsel %vm107, %v740, 0.0
  %751 = vadd.xlane.f32.xlu0 %v750
  %v752 = vpop.xlane.xlu0 %751
  %v753 = vmul.f32 %v743, %v120
  %v754 = vmul.f32 %v746, %v120
  %v755 = vmul.f32 %v749, %v120
  %v756 = vmul.f32 %v752, %v120
  %v757 = vadd.f32 %v753, 1e-05
  %v758 = vadd.f32 %v754, 1e-05
  %v759 = vadd.f32 %v755, 1e-05
  %v760 = vadd.f32 %v756, 1e-05
  %v761 = vrsqrt.pop %v757
  %v762 = vrsqrt.pop %v758
  %v763 = vrsqrt.pop %v759
  %v764 = vrsqrt.pop %v760
  %v765 = vmul.f32 %v733, %v761
  %v766 = vmul.f32 %v734, %v762
  %v767 = vmul.f32 %v735, %v763
  %v768 = vmul.f32 %v736, %v764
  %v769 = vlaneseq
  %v770 = vshrl.u32 %v769, 7
  %v771 = vsub.s32 0, %v770
  %v772 = vrot.slane %v33, %v771
  %v773 = vmul.f32 %v765, %v772
  %v774 = vmul.f32 %v766, %v772
  %v775 = vmul.f32 %v767, %v772
  %v776 = vmul.f32 %v768, %v772
  %v777 = vlaneseq
  %v778 = vshrl.u32 %v777, 7
  %v779 = vsub.s32 0, %v778
  %v780 = vrot.slane %v34, %v779
  %v781 = vadd.f32 %v773, %v780
  %v782 = vadd.f32 %v774, %v780
  %v783 = vadd.f32 %v775, %v780
  %v784 = vadd.f32 %v776, %v780
  %v785 = vrot.slane %v781, 7
  %v786 = vrot.slane %v782, 7
  %v787 = vrot.slane %v783, 7
  %v788 = vrot.slane %v784, 7
  %v789 = vsel %vm181, %v787, %v788
  %v790 = vsel %vm181, %v786, %v787
  %v791 = vsel %vm181, %v785, %v786
  %v792 = vsel %vm181, %v788, %v785
  %v793 = vsel %vm88, %v97, %v792
  %v794 = vsel %vm89, %v97, %v791
  %v795 = vsel %vm90, %v105, %v790
  %v796 = vsel %vm91, %v105, %v789
  %801 = vrot.lane.b32.xlu0 %v793, 32
  %v802 = vpop.permute.xlu0 %801
  %803 = vrot.lane.b32.xlu0 %v794, 32
  %v804 = vpop.permute.xlu0 %803
  %805 = vrot.lane.b32.xlu0 %v795, 32
  %v806 = vpop.permute.xlu0 %805
  %807 = vrot.lane.b32.xlu0 %v796, 32
  %v808 = vpop.permute.xlu0 %807
  %v813 = vsel %vm107, %v781, %v802
  %v814 = vsel %vm107, %v782, %v804
  %v815 = vsel %vm107, %v783, %v806
  %v816 = vsel %vm107, %v784, %v808
  %v817 = vpack.c.bf16 %v814, %v813
  %v818 = vpack.c.bf16 %v816, %v815
  %v819 = vld [vmem:[%s5] sm:$0xff]
  %v820 = vld [vmem:[%s5 + $0x8] sm:$0xff]
  %v821 = vld [vmem:[%s5 + $0x10] sm:$0xff]
  %v822 = vld [vmem:[%s5 + $0x18] sm:$0xff]
  %v823 = vld [vmem:[%s5 + $0x20] sm:$0xff]
  %v824 = vld [vmem:[%s5 + $0x28] sm:$0xff]
  %v825 = vld [vmem:[%s5 + $0x30] sm:$0xff]
  %v826 = vld [vmem:[%s5 + $0x38] sm:$0xff]
  %v835 = vunpack.c.l.b16 %v819
  %v836 = vunpack.c.h.b16 %v819
  %v837 = vunpack.c.l.b16 %v820
  %v838 = vunpack.c.h.b16 %v820
  %v839 = vunpack.c.l.b16 %v821
  %v840 = vunpack.c.h.b16 %v821
  %v841 = vunpack.c.l.b16 %v822
  %v842 = vunpack.c.h.b16 %v822
  %v843 = vunpack.c.l.b16 %v823
  %v844 = vunpack.c.h.b16 %v823
  %v845 = vunpack.c.l.b16 %v824
  %v846 = vunpack.c.h.b16 %v824
  %v847 = vunpack.c.l.b16 %v825
  %v848 = vunpack.c.h.b16 %v825
  %v849 = vunpack.c.l.b16 %v826
  %v850 = vunpack.c.h.b16 %v826
  %v851 = vpack.c.b16 %v837, %v835
  %v852 = vpack.c.b16 %v838, %v836
  %v853 = vpack.c.b16 %v841, %v839
  %v854 = vpack.c.b16 %v842, %v840
  %v855 = vpack.c.b16 %v845, %v843
  %v856 = vpack.c.b16 %v846, %v844
  %v857 = vpack.c.b16 %v849, %v847
  %v858 = vpack.c.b16 %v850, %v848
  %v868 = vsel %vm244, %v817, 0
  %v871 = vsel %vm244, %v818, 0
  %873 = vmatprep.subr.bf16.mxu0 0
  %874 = vmatpush1.bf16.msra.mxu0 0
  %875 = vmatprep.subr.bf16.mxu0 0
  %876 = vmatpush1.bf16.msra.mxu0 0
  %877 = vmatprep.subr.bf16.mxu0 0
  %878 = vmatpush1.bf16.msra.mxu0 0
  %879 = vmatprep.subr.bf16.mxu0 0
  %880 = vmatpush1.bf16.msra.mxu0 0
  %881 = vmatprep.subr.bf16.mxu0 %v858
  %882 = vmatpush1.bf16.msra.mxu0 %v857
  %883 = vmatprep.subr.bf16.mxu0 %v856
  %884 = vmatpush1.bf16.msra.mxu0 %v855
  %885 = vmatprep.subr.bf16.mxu0 %v854
  %886 = vmatpush1.bf16.msra.mxu0 %v853
  %887 = vmatprep.subr.bf16.mxu0 %v852
  %888 = vmatpush1.bf16.msra.mxu0 %v851
  %889 = vmatprep.subr.bf16.mxu0 0
  %890 = vmatpush2.bf16.msra.mxu0 0
  %891 = vmatprep.subr.bf16.mxu0 0
  %892 = vmatpush2.bf16.msra.mxu0 0
  %893 = vmatprep.subr.bf16.mxu0 0
  %894 = vmatpush2.bf16.msra.mxu0 0
  %895 = vmatprep.subr.bf16.mxu0 0
  %896 = vmatpush2.bf16.msra.mxu0 0
  %897 = vmatprep.subr.bf16.mxu0 0
  %898 = vmatpush2.bf16.msra.mxu0 0
  %899 = vmatprep.subr.bf16.mxu0 0
  %900 = vmatpush2.bf16.msra.mxu0 0
  %901 = vmatprep.subr.bf16.mxu0 0
  %902 = vmatpush2.bf16.msra.mxu0 0
  %903 = vmatprep.subr.bf16.mxu0 0
  %904 = vmatpush2.bf16.msra.mxu0 0
  %905 = vmatprep.mubr.bf16.mxu0 0
  %906 = vmatmul.mubr.bf16.gmra.mxu0 %v868
  %v907 = vpop.f32.mrf.mxu0
  %v908 = vadd.f32 0.0, %v907
  %v909 = vpop.f32.mrf.mxu0
  %v910 = vadd.f32 0.0, %v909
  %v911 = vpop.f32.mrf.mxu0
  %v912 = vadd.f32 0.0, %v911
  %v913 = vpop.f32.mrf.mxu0
  %v914 = vadd.f32 0.0, %v913
  %915 = vmatprep.mubr.bf16.mxu0 0
  %916 = vmatmul.mubr.bf16.gmra.mxu0 %v871
  %v917 = vpop.f32.mrf.mxu0
  %v918 = vadd.f32 0.0, %v917
  %v919 = vpop.f32.mrf.mxu0
  %v920 = vadd.f32 0.0, %v919
  %v921 = vpop.f32.mrf.mxu0
  %v922 = vadd.f32 0.0, %v921
  %v923 = vpop.f32.mrf.mxu0
  %v924 = vadd.f32 0.0, %v923
  %925 = vdwg.mxu0
  %v926 = vmax.f32 %v908, 0.0
  %v927 = vmax.f32 %v912, 0.0
  %v928 = vmax.f32 %v918, 0.0
  %v929 = vmax.f32 %v922, 0.0
  %v930 = vmul.f32 %v926, %v926
  %v931 = vmul.f32 %v927, %v927
  %v932 = vmul.f32 %v928, %v928
  %v933 = vmul.f32 %v929, %v929
  %v934 = vpack.c.bf16 %v931, %v930
  %v935 = vpack.c.bf16 %v933, %v932
  %v936 = vld [vmem:[%s6] sm:$0xf]
  %v937 = vld [vmem:[%s6 + $0x4] sm:$0xf]
  %v938 = vld [vmem:[%s6 + $0x8] sm:$0xf]
  %v939 = vld [vmem:[%s6 + $0xc] sm:$0xf]
  %v940 = vld [vmem:[%s6 + $0x10] sm:$0xf]
  %v941 = vld [vmem:[%s6 + $0x14] sm:$0xf]
  %v942 = vld [vmem:[%s6 + $0x18] sm:$0xf]
  %v943 = vld [vmem:[%s6 + $0x1c] sm:$0xf]
  %v944 = vld [vmem:[%s6 + $0x20] sm:$0xf]
  %v945 = vld [vmem:[%s6 + $0x24] sm:$0xf]
  %v946 = vld [vmem:[%s6 + $0x28] sm:$0xf]
  %v947 = vld [vmem:[%s6 + $0x2c] sm:$0xf]
  %v948 = vld [vmem:[%s6 + $0x30] sm:$0xf]
  %v949 = vld [vmem:[%s6 + $0x34] sm:$0xf]
  %v950 = vld [vmem:[%s6 + $0x38] sm:$0xf]
  %v951 = vld [vmem:[%s6 + $0x3c] sm:$0xf]
  %v968 = vunpack.c.l.b16 %v936
  %v969 = vunpack.c.l.b16 %v937
  %v970 = vunpack.c.l.b16 %v938
  %v971 = vunpack.c.l.b16 %v939
  %v972 = vunpack.c.l.b16 %v940
  %v973 = vunpack.c.l.b16 %v941
  %v974 = vunpack.c.l.b16 %v942
  %v975 = vunpack.c.l.b16 %v943
  %v976 = vunpack.c.l.b16 %v944
  %v977 = vunpack.c.l.b16 %v945
  %v978 = vunpack.c.l.b16 %v946
  %v979 = vunpack.c.l.b16 %v947
  %v980 = vunpack.c.l.b16 %v948
  %v981 = vunpack.c.l.b16 %v949
  %v982 = vunpack.c.l.b16 %v950
  %v983 = vunpack.c.l.b16 %v951
  %v984 = vpack.c.b16 %v969, %v968
  %v985 = vpack.c.b16 %v971, %v970
  %v986 = vpack.c.b16 %v973, %v972
  %v987 = vpack.c.b16 %v975, %v974
  %v988 = vpack.c.b16 %v977, %v976
  %v989 = vpack.c.b16 %v979, %v978
  %v990 = vpack.c.b16 %v981, %v980
  %v991 = vpack.c.b16 %v983, %v982
  %1000 = vmatprep.subr.bf16.mxu0 0
  %1001 = vmatpush1.bf16.msra.mxu0 %v991
  %1002 = vmatprep.subr.bf16.mxu0 0
  %1003 = vmatpush1.bf16.msra.mxu0 %v990
  %1004 = vmatprep.subr.bf16.mxu0 0
  %1005 = vmatpush1.bf16.msra.mxu0 %v989
  %1006 = vmatprep.subr.bf16.mxu0 0
  %1007 = vmatpush1.bf16.msra.mxu0 %v988
  %1008 = vmatprep.subr.bf16.mxu0 0
  %1009 = vmatpush1.bf16.msra.mxu0 %v987
  %1010 = vmatprep.subr.bf16.mxu0 0
  %1011 = vmatpush1.bf16.msra.mxu0 %v986
  %1012 = vmatprep.subr.bf16.mxu0 0
  %1013 = vmatpush1.bf16.msra.mxu0 %v985
  %1014 = vmatprep.subr.bf16.mxu0 0
  %1015 = vmatpush1.bf16.msra.mxu0 %v984
  %1016 = vmatprep.subr.bf16.mxu0 0
  %1017 = vmatpush2.bf16.msra.mxu0 0
  %1018 = vmatprep.subr.bf16.mxu0 0
  %1019 = vmatpush2.bf16.msra.mxu0 0
  %1020 = vmatprep.subr.bf16.mxu0 0
  %1021 = vmatpush2.bf16.msra.mxu0 0
  %1022 = vmatprep.subr.bf16.mxu0 0
  %1023 = vmatpush2.bf16.msra.mxu0 0
  %1024 = vmatprep.subr.bf16.mxu0 0
  %1025 = vmatpush2.bf16.msra.mxu0 0
  %1026 = vmatprep.subr.bf16.mxu0 0
  %1027 = vmatpush2.bf16.msra.mxu0 0
  %1028 = vmatprep.subr.bf16.mxu0 0
  %1029 = vmatpush2.bf16.msra.mxu0 0
  %1030 = vmatprep.subr.bf16.mxu0 0
  %1031 = vmatpush2.bf16.msra.mxu0 0
  %1032 = vmatprep.mubr.bf16.mxu0 0
  %1033 = vmatmul.mubr.bf16.gmra.mxu0 %v934
  %v1034 = vpop.f32.mrf.mxu0
  %v1035 = vadd.f32 0.0, %v1034
  %v1036 = vpop.f32.mrf.mxu0
  %v1037 = vpop.f32.mrf.mxu0
  %v1038 = vadd.f32 0.0, %v1037
  %v1039 = vpop.f32.mrf.mxu0
  %1040 = vmatprep.mubr.bf16.mxu0 0
  %1041 = vmatmul.mubr.bf16.gmra.mxu0 %v935
  %v1042 = vpop.f32.mrf.mxu0
  %v1043 = vadd.f32 0.0, %v1042
  %v1044 = vpop.f32.mrf.mxu0
  %v1045 = vpop.f32.mrf.mxu0
  %v1046 = vadd.f32 0.0, %v1045
  %v1047 = vpop.f32.mrf.mxu0
  %1048 = vdwg.mxu0
  %v1049 = vand.u32 2147483647, %v910
  %v1050 = vand.u32 2147483647, %v914
  %v1051 = vand.u32 2147483647, %v920
  %v1052 = vand.u32 2147483647, %v924
  %v1053 = vsub.f32 0.0, %v1049
  %v1054 = vsub.f32 0.0, %v1050
  %v1055 = vsub.f32 0.0, %v1051
  %v1056 = vsub.f32 0.0, %v1052
  %v1057 = vmul.f32 %v1053, 1.442695
  %v1058 = vpow.pop %v1057
  %v1059 = vmul.f32 %v1054, 1.442695
  %v1060 = vpow.pop %v1059
  %v1061 = vmul.f32 %v1055, 1.442695
  %v1062 = vpow.pop %v1061
  %v1063 = vmul.f32 %v1056, 1.442695
  %v1064 = vpow.pop %v1063
  %vm1065 = vcmp.ge.f32.partialorder %v910, 0.0
  %vm1066 = vcmp.ge.f32.partialorder %v914, 0.0
  %vm1067 = vcmp.ge.f32.partialorder %v920, 0.0
  %vm1068 = vcmp.ge.f32.partialorder %v924, 0.0
  %v1069 = vadd.f32 %v1058, 1.0
  %v1070 = vadd.f32 %v1060, 1.0
  %v1071 = vadd.f32 %v1062, 1.0
  %v1072 = vadd.f32 %v1064, 1.0
  %v1073 = vrcp.pop %v1069
  %v1074 = vmul.f32 1.0, %v1073
  %v1075 = vrcp.pop %v1070
  %v1076 = vmul.f32 1.0, %v1075
  %v1077 = vrcp.pop %v1071
  %v1078 = vmul.f32 1.0, %v1077
  %v1079 = vrcp.pop %v1072
  %v1080 = vmul.f32 1.0, %v1079
  %v1081 = vmul.f32 %v1058, %v1073
  %v1082 = vmul.f32 %v1060, %v1075
  %v1083 = vmul.f32 %v1062, %v1077
  %v1084 = vmul.f32 %v1064, %v1079
  %v1085 = vsel %vm1065, %v1074, %v1081
  %v1086 = vsel %vm1066, %v1076, %v1082
  %v1087 = vsel %vm1067, %v1078, %v1083
  %v1088 = vsel %vm1068, %v1080, %v1084
  %v1089 = vmul.f32 %v1085, %v1035
  %v1090 = vmul.f32 %v1086, %v1038
  %v1091 = vmul.f32 %v1087, %v1043
  %v1092 = vmul.f32 %v1088, %v1046
  %v1093 = vadd.f32 %v713, %v1089
  %v1094 = vadd.f32 %v714, %v1090
  %v1095 = vadd.f32 %v715, %v1091
  %v1096 = vadd.f32 %v716, %v1092
  %1097 = vst.msk [vmem:[%s7] sm:$0xff] %vm107, %v1093
  %1098 = vst.msk [vmem:[%s7 + $0x8] sm:$0xff] %vm107, %v1094
  %1099 = vst.msk [vmem:[%s7 + $0x10] sm:$0xff] %vm107, %v1095
  %1100 = vst.msk [vmem:[%s7 + $0x18] sm:$0xff] %vm107, %v1096
  // Predicated region
  $region30: #{rwkv_block_forward.1} parent=0 // pred_check
    _
  $region31: #{rwkv_block_forward.1} parent=0 // pred_check_branch
    %1102 = sbr.rel (0) target = $region33
  $region32: #{rwkv_block_forward.1} parent=0 // pred_region
    _
  $region33: #{rwkv_block_forward.1} parent=0 // pred_fallthru
    _
  // Predicated region
  $region34: #{rwkv_block_forward.1} parent=0 // pred_check
    _
  $region35: #{rwkv_block_forward.1} parent=0 // pred_check_branch
    %1104 = sbr.rel (0) target = $region37
  $region36: #{rwkv_block_forward.1} parent=0 // pred_region
    _
  $region37: #{rwkv_block_forward.1} parent=0 // pred_fallthru
    _

</llo_original>
